<compile_context>
chip_gen: v6e
topology: v6e:2x2x1
jax: 0.10.0
libtpu: 0.0.40
codegen_flags: <defaults>
</compile_context>

<pallas_src>
import functools

import jax
import jax.numpy as jnp
from jax.experimental import pallas as pl
from jax.experimental.pallas import tpu as pltpu


def _round_up(n, m):
    return ((n + m - 1) // m) * m


def daonet_kernel(x_ref, w1_ref, b1_ref, w2_ref, b2_ref, wht_ref, bht_ref, out_ref):
    # x / all weights arrive as bf16; every MXU matmul accumulates in f32.
    x = x_ref[...]                                                      # (tb, 50) bf16

    # hidden1 (50 -> 32) + ReLU
    h1 = jnp.dot(x, w1_ref[...], preferred_element_type=jnp.float32) + b1_ref[...]
    h1 = jnp.maximum(h1, 0.0).astype(jnp.bfloat16)                      # (tb, 32) bf16

    # hidden2 (32 -> 16) + ReLU
    h2 = jnp.dot(h1, w2_ref[...], preferred_element_type=jnp.float32) + b2_ref[...]
    h2 = jnp.maximum(h2, 0.0)                                           # (tb, 16) f32

    # Fused heads, computed transposed so the store is lane-dense:
    #   out_t = W_heads^T (8,16) @ h2^T (16,tb) -> (8, tb)
    # rows [0:3] = value, row [3] = remoteness, rows [4:8] = zero padding.
    # The f32 transpose goes to the otherwise-idle XLU; cast to bf16 after.
    h2_t = h2.T.astype(jnp.bfloat16)                                    # (16, tb) bf16
    out_t = jnp.dot(wht_ref[...], h2_t, preferred_element_type=jnp.float32)
    out_ref[...] = (out_t + bht_ref[...]).astype(out_ref.dtype)


@functools.partial(jax.jit, static_argnames=("tb",))
def daonet_forward(x, params, *, tb=4096):
    """x: [B, 50] float32. Returns (value [B, 3], remoteness [B, 1]), float32."""
    w1, b1, w2, b2, wv, bv, wr, br = params
    B, F = x.shape
    assert F == 50

    # --- fuse the two heads into one matmul, zero-pad to 8 outputs, pre-transpose ---
    wh = jnp.concatenate([wv, wr], axis=1)            # (16, 4)
    bh = jnp.concatenate([bv, br], axis=1)            # (1, 4)
    wh = jnp.pad(wh, ((0, 0), (0, 4)))                # (16, 8) — out rows 4..7 are padding
    bh = jnp.pad(bh, ((0, 0), (0, 4)))                # (1, 8)
    wh_t = wh.T.astype(jnp.bfloat16)                  # (8, 16) bf16
    bh_t = bh.T                                       # (8, 1)  f32

    # --- bf16 operands for every matmul (f32 MXU accumulation in-kernel) ---
    x_in = x.astype(jnp.bfloat16)
    w1_in = w1.astype(jnp.bfloat16)
    w2_in = w2.astype(jnp.bfloat16)

    # --- batch tiling ---
    # Single tile when the batch fits: pad only to a multiple of 16 (full bf16
    # sublane packing). Otherwise clamp the requested tile to [128, 8192] and a
    # multiple of 128 so the transposed (8, tb) output block stays lane-aligned.
    tb = int(tb)
    if B <= tb and B <= 8192:
        tb = _round_up(max(B, 16), 16)
    else:
        tb = min(max(_round_up(min(tb, B), 128), 128), 8192)
    b_pad = _round_up(B, tb)
    if b_pad != B:
        x_in = jnp.pad(x_in, ((0, b_pad - B), (0, 0)))
    grid = (b_pad // tb,)

    # VMEM budget: ~2.3 KB per tile row (double-buffered x, f32/bf16 intermediates,
    # lane-dense out) + headroom; floor 32 MiB (safe on v5e/v6e/v7x), cap 48 MiB
    # to stay within v7x's 64 MiB physical VMEM.
    vmem_limit = int(min(max(tb * 2304 + (4 << 20), 32 << 20), 48 << 20))

    # Advisory cost so XLA schedules the surrounding cast/concat/slice ops sensibly.
    cost = pl.CostEstimate(
        flops=2 * b_pad * (50 * 32 + 32 * 16 + 16 * 8),
        transcendentals=0,
        bytes_accessed=b_pad * (50 * 2 + 8 * 4) + 8 * 1024,
    )

    # weights / biases: full-array resident blocks (never re-fetched across tiles)
    def full(a):
        return pl.BlockSpec(a.shape, lambda i, _n=a.ndim: (0,) * _n)

    out_t = pl.pallas_call(
        daonet_kernel,
        out_shape=jax.ShapeDtypeStruct((8, b_pad), jnp.float32),
        grid=grid,
        in_specs=[
            pl.BlockSpec((tb, F), lambda i: (i, 0)),   # x streams per batch tile
            full(w1_in), full(b1), full(w2_in), full(b2),
            full(wh_t), full(bh_t),
        ],
        out_specs=pl.BlockSpec((8, tb), lambda i: (0, i)),  # lane-dense output slab
        compiler_params=pltpu.CompilerParams(
            dimension_semantics=("parallel",),  # v7x: shard batch tiles over 2 TCs
            vmem_limit_bytes=vmem_limit,
        ),
        cost_estimate=cost,
    )(x_in, w1_in, b1, w2_in, b2, wh_t, bh_t)

    value = out_t[0:3, :B].T        # (B, 3)
    remoteness = out_t[3:4, :B].T   # (B, 1)
    return value, remoteness


def init_params(key):
    # Deterministic synthetic init mimicking nn.Linear's uniform(-1/sqrt(fan_in), ...)
    # Weights stored [in, out] so the kernel computes x @ W (PyTorch W pre-transposed).
    def linear(key, fan_in, fan_out):
        kw, kb = jax.random.split(key)
        bound = 1.0 / jnp.sqrt(fan_in)
        w = jax.random.uniform(kw, (fan_in, fan_out), jnp.float32, -bound, bound)
        b = jax.random.uniform(kb, (1, fan_out), jnp.float32, -bound, bound)
        return w, b

    k1, k2, k3, k4 = jax.random.split(key, 4)
    w1, b1 = linear(k1, 50, 32)
    w2, b2 = linear(k2, 32, 16)
    wv, bv = linear(k3, 16, 3)
    wr, br = linear(k4, 16, 1)
    return (w1, b1, w2, b2, wv, bv, wr, br)


def daonet_reference(x, params):
    # Mirrors the kernel's numerics: bf16 matmul operands, f32 accumulation,
    # f32 bias adds / ReLU.
    w1, b1, w2, b2, wv, bv, wr, br = params
    bf = jnp.bfloat16
    h1 = jnp.dot(x.astype(bf), w1.astype(bf), preferred_element_type=jnp.float32) + b1
    h1 = jax.nn.relu(h1).astype(bf)
    h2 = jnp.dot(h1, w2.astype(bf), preferred_element_type=jnp.float32) + b2
    h2 = jax.nn.relu(h2).astype(bf)
    value = jnp.dot(h2, wv.astype(bf), preferred_element_type=jnp.float32) + bv
    remoteness = jnp.dot(h2, wr.astype(bf), preferred_element_type=jnp.float32) + br
    return value, remoteness


if __name__ == "__main__":
    key = jax.random.PRNGKey(0)
    k_x, k_p, k_x2 = jax.random.split(key, 3)
    params = init_params(k_p)

    # small batch (single padded tile)
    B = 8
    x = jax.random.normal(k_x, (B, 50), dtype=jnp.float32)
    value, remoteness = daonet_forward(x, params)
    jax.block_until_ready((value, remoteness))

    ref_value, ref_remote = daonet_reference(x, params)
    assert value.shape == (B, 3) and remoteness.shape == (B, 1)
    assert jnp.allclose(value, ref_value, atol=2e-2, rtol=2e-2)
    assert jnp.allclose(remoteness, ref_remote, atol=2e-2, rtol=2e-2)

    # larger, non-tile-multiple batch with a small tile: exercises the multi-tile
    # grid, batch padding, and the lane-dense transposed output path.
    B2 = 1000
    x2 = jax.random.normal(k_x2, (B2, 50), dtype=jnp.float32)
    v2, r2 = daonet_forward(x2, params, tb=256)
    jax.block_until_ready((v2, r2))
    rv2, rr2 = daonet_reference(x2, params)
    assert v2.shape == (B2, 3) and r2.shape == (B2, 1)
    assert jnp.allclose(v2, rv2, atol=2e-2, rtol=2e-2)
    assert jnp.allclose(r2, rr2, atol=2e-2, rtol=2e-2)

    print("KERNEL_OK")
</pallas_src>

<mosaic_0001>
module attributes {stable_mosaic.version = 11 : i64} {
  func.func @daonet_kernel(%arg0: i32, %arg1: memref<16x50xbf16, #tpu.memory_space<vmem>>, %arg2: memref<50x32xbf16, #tpu.memory_space<vmem>>, %arg3: memref<1x32xf32, #tpu.memory_space<vmem>>, %arg4: memref<32x16xbf16, #tpu.memory_space<vmem>>, %arg5: memref<1x16xf32, #tpu.memory_space<vmem>>, %arg6: memref<8x16xbf16, #tpu.memory_space<vmem>>, %arg7: memref<8x1xf32, #tpu.memory_space<vmem>>, %arg8: memref<8x16xf32, #tpu.memory_space<vmem>>) attributes {dimension_semantics = [#tpu.dimension_semantics<parallel>], iteration_bounds = array<i64: 1>, scalar_prefetch = 0 : i64, scratch_operands = 0 : i64, tpu.core_type = #tpu.core_type<tc>, window_params = [{transform_indices = @transform_0, window_bounds = array<i64: 16, 50>}, {pipeline_mode = #tpu.pipeline_mode<synchronous>, transform_indices = @transform_1, window_bounds = array<i64: 50, 32>}, {pipeline_mode = #tpu.pipeline_mode<synchronous>, transform_indices = @transform_2, window_bounds = array<i64: 1, 32>}, {pipeline_mode = #tpu.pipeline_mode<synchronous>, transform_indices = @transform_3, window_bounds = array<i64: 32, 16>}, {pipeline_mode = #tpu.pipeline_mode<synchronous>, transform_indices = @transform_4, window_bounds = array<i64: 1, 16>}, {pipeline_mode = #tpu.pipeline_mode<synchronous>, transform_indices = @transform_5, window_bounds = array<i64: 8, 16>}, {pipeline_mode = #tpu.pipeline_mode<synchronous>, transform_indices = @transform_6, window_bounds = array<i64: 8, 1>}, {transform_indices = @transform_7, window_bounds = array<i64: 8, 16>}]} {
    %c0 = arith.constant 0 : index
    %c0_0 = arith.constant 0 : index
    %0 = vector.load %arg1[%c0, %c0_0] : memref<16x50xbf16, #tpu.memory_space<vmem>>, vector<16x50xbf16>
    %c0_1 = arith.constant 0 : index
    %c0_2 = arith.constant 0 : index
    %1 = vector.load %arg2[%c0_1, %c0_2] : memref<50x32xbf16, #tpu.memory_space<vmem>>, vector<50x32xbf16>
    %cst = arith.constant dense<0.000000e+00> : vector<16x32xf32>
    %2 = tpu.matmul %0, %1, %cst {dimension_numbers = #tpu.dot_dimension_numbers<[1], [0], [0], [1], [0, 0, 1, 1], [], []>} : vector<16x50xbf16>, vector<50x32xbf16>, vector<16x32xf32> -> vector<16x32xf32>
    %c0_3 = arith.constant 0 : index
    %c0_4 = arith.constant 0 : index
    %3 = vector.load %arg3[%c0_3, %c0_4] : memref<1x32xf32, #tpu.memory_space<vmem>>, vector<1x32xf32>
    %4 = vector.broadcast %3 : vector<1x32xf32> to vector<16x32xf32>
    %5 = arith.addf %2, %4 : vector<16x32xf32>
    %cst_5 = arith.constant 0.000000e+00 : f32
    %6 = vector.broadcast %cst_5 : f32 to vector<16x32xf32>
    %7 = arith.maximumf %5, %6 : vector<16x32xf32>
    %8 = arith.truncf %7 : vector<16x32xf32> to vector<16x32xbf16>
    %c0_6 = arith.constant 0 : index
    %c0_7 = arith.constant 0 : index
    %9 = vector.load %arg4[%c0_6, %c0_7] : memref<32x16xbf16, #tpu.memory_space<vmem>>, vector<32x16xbf16>
    %cst_8 = arith.constant dense<0.000000e+00> : vector<16x16xf32>
    %10 = tpu.matmul %8, %9, %cst_8 {dimension_numbers = #tpu.dot_dimension_numbers<[1], [0], [0], [1], [0, 0, 1, 1], [], []>} : vector<16x32xbf16>, vector<32x16xbf16>, vector<16x16xf32> -> vector<16x16xf32>
    %c0_9 = arith.constant 0 : index
    %c0_10 = arith.constant 0 : index
    %11 = vector.load %arg5[%c0_9, %c0_10] : memref<1x16xf32, #tpu.memory_space<vmem>>, vector<1x16xf32>
    %12 = vector.broadcast %11 : vector<1x16xf32> to vector<16x16xf32>
    %13 = arith.addf %10, %12 : vector<16x16xf32>
    %cst_11 = arith.constant 0.000000e+00 : f32
    %14 = vector.broadcast %cst_11 : f32 to vector<16x16xf32>
    %15 = arith.maximumf %13, %14 : vector<16x16xf32>
    %16 = tpu.transpose %15, [1, 0] : vector<16x16xf32> -> vector<16x16xf32>
    %17 = arith.truncf %16 : vector<16x16xf32> to vector<16x16xbf16>
    %c0_12 = arith.constant 0 : index
    %c0_13 = arith.constant 0 : index
    %18 = vector.load %arg6[%c0_12, %c0_13] : memref<8x16xbf16, #tpu.memory_space<vmem>>, vector<8x16xbf16>
    %cst_14 = arith.constant dense<0.000000e+00> : vector<8x16xf32>
    %19 = tpu.matmul %18, %17, %cst_14 {dimension_numbers = #tpu.dot_dimension_numbers<[1], [0], [0], [1], [0, 0, 1, 1], [], []>} : vector<8x16xbf16>, vector<16x16xbf16>, vector<8x16xf32> -> vector<8x16xf32>
    %c0_15 = arith.constant 0 : index
    %c0_16 = arith.constant 0 : index
    %20 = vector.load %arg7[%c0_15, %c0_16] : memref<8x1xf32, #tpu.memory_space<vmem>>, vector<8x1xf32>
    %21 = vector.broadcast %20 : vector<8x1xf32> to vector<8x16xf32>
    %22 = arith.addf %19, %21 : vector<8x16xf32>
    %c0_17 = arith.constant 0 : index
    %c0_18 = arith.constant 0 : index
    %23 = vector.load %arg8[%c0_17, %c0_18] : memref<8x16xf32, #tpu.memory_space<vmem>>, vector<8x16xf32>
    tpu.vector_store %arg8[%c0_17, %c0_18], %22 {strides = array<i32>} : memref<8x16xf32, #tpu.memory_space<vmem>>, vector<8x16xf32>,
    return
  }
  func.func @transform_0(%arg0: i32) -> (i32, i32) {
    %c0_i32 = arith.constant 0 : i32
    %c0_i32_0 = arith.constant 0 : i32
    return %arg0, %c0_i32 : i32, i32
  }
  func.func @transform_1(%arg0: i32) -> (i32, i32) {
    %c0_i32 = arith.constant 0 : i32
    %c0_i32_0 = arith.constant 0 : i32
    %c0_i32_1 = arith.constant 0 : i32
    return %c0_i32, %c0_i32_0 : i32, i32
  }
  func.func @transform_2(%arg0: i32) -> (i32, i32) {
    %c0_i32 = arith.constant 0 : i32
    %c0_i32_0 = arith.constant 0 : i32
    %c0_i32_1 = arith.constant 0 : i32
    return %c0_i32, %c0_i32_0 : i32, i32
  }
  func.func @transform_3(%arg0: i32) -> (i32, i32) {
    %c0_i32 = arith.constant 0 : i32
    %c0_i32_0 = arith.constant 0 : i32
    %c0_i32_1 = arith.constant 0 : i32
    return %c0_i32, %c0_i32_0 : i32, i32
  }
  func.func @transform_4(%arg0: i32) -> (i32, i32) {
    %c0_i32 = arith.constant 0 : i32
    %c0_i32_0 = arith.constant 0 : i32
    %c0_i32_1 = arith.constant 0 : i32
    return %c0_i32, %c0_i32_0 : i32, i32
  }
  func.func @transform_5(%arg0: i32) -> (i32, i32) {
    %c0_i32 = arith.constant 0 : i32
    %c0_i32_0 = arith.constant 0 : i32
    %c0_i32_1 = arith.constant 0 : i32
    return %c0_i32, %c0_i32_0 : i32, i32
  }
  func.func @transform_6(%arg0: i32) -> (i32, i32) {
    %c0_i32 = arith.constant 0 : i32
    %c0_i32_0 = arith.constant 0 : i32
    %c0_i32_1 = arith.constant 0 : i32
    return %c0_i32, %c0_i32_0 : i32, i32
  }
  func.func @transform_7(%arg0: i32) -> (i32, i32) {
    %c0_i32 = arith.constant 0 : i32
    %c0_i32_0 = arith.constant 0 : i32
    return %c0_i32, %arg0 : i32, i32
  }
}

</mosaic_0001>

<llo_original>
// kernel: daonet_forward.1
$region0: #{daonet_forward.1}
  #allocation0 [shape = 'u32[]', space=smem, size = 0x4, offset = 0x4, fixed_abs, tag = 'smem constant byte address 0x4 - core index']
  #allocation1 [shape = 'u32[144,128]{1,0:T(1,128)}', space=vmem, size = 0x12000, scoped, tag = 'internal scratch']
  %s0 = inlined_call_operand.vmem [shape: bf16[16,50], index: 0, kind: input, shape index: {}]
  %s1 = inlined_call_operand.vmem [shape: bf16[50,32], index: 1, kind: input, shape index: {}]
  %s2 = inlined_call_operand.vmem [shape: f32[1,32], index: 2, kind: input, shape index: {}]
  %s3 = inlined_call_operand.vmem [shape: bf16[32,16], index: 3, kind: input, shape index: {}]
  %s4 = inlined_call_operand.vmem [shape: f32[1,16], index: 4, kind: input, shape index: {}]
  %s5 = inlined_call_operand.vmem [shape: bf16[8,16], index: 5, kind: input, shape index: {}]
  %s6 = inlined_call_operand.vmem [shape: f32[8,1], index: 6, kind: input, shape index: {}]
  %s7 = inlined_call_operand.vmem [shape: f32[8,16], index: 7, kind: output, shape index: {}]
  %s8 = sld [smem:[#allocation0]]
  $region38: #{daonet_forward.1} parent=0
    _
  %s10 = ssub.s32 1, %s8
  %s11 = scalar_select 0, %s10, %s8
  // Predicated region
  $region2: #{daonet_forward.1} parent=0 // pred_check
    _
  $region3: #{daonet_forward.1} parent=0 // pred_check_branch
    %13 = sbr.rel (0) target = $region5
  $region4: #{daonet_forward.1} parent=0 // pred_region
    _
  $region5: #{daonet_forward.1} parent=0 // pred_fallthru
    _
  // Predicated region
  $region6: #{daonet_forward.1} parent=0 // pred_check
    _
  $region7: #{daonet_forward.1} parent=0 // pred_check_branch
    %15 = sbr.rel (0) target = $region9
  $region8: #{daonet_forward.1} parent=0 // pred_region
    _
  $region9: #{daonet_forward.1} parent=0 // pred_fallthru
    _
  // Predicated region
  $region10: #{daonet_forward.1} parent=0 // pred_check
    _
  $region11: #{daonet_forward.1} parent=0 // pred_check_branch
    %17 = sbr.rel (0) target = $region13
  $region12: #{daonet_forward.1} parent=0 // pred_region
    _
  $region13: #{daonet_forward.1} parent=0 // pred_fallthru
    _
  // Predicated region
  $region14: #{daonet_forward.1} parent=0 // pred_check
    _
  $region15: #{daonet_forward.1} parent=0 // pred_check_branch
    %19 = sbr.rel (0) target = $region17
  $region16: #{daonet_forward.1} parent=0 // pred_region
    _
  $region17: #{daonet_forward.1} parent=0 // pred_fallthru
    _
  // Predicated region
  $region18: #{daonet_forward.1} parent=0 // pred_check
    _
  $region19: #{daonet_forward.1} parent=0 // pred_check_branch
    %21 = sbr.rel (0) target = $region21
  $region20: #{daonet_forward.1} parent=0 // pred_region
    _
  $region21: #{daonet_forward.1} parent=0 // pred_fallthru
    _
  // Predicated region
  $region22: #{daonet_forward.1} parent=0 // pred_check
    _
  $region23: #{daonet_forward.1} parent=0 // pred_check_branch
    %23 = sbr.rel (0) target = $region25
  $region24: #{daonet_forward.1} parent=0 // pred_region
    _
  $region25: #{daonet_forward.1} parent=0 // pred_fallthru
    _
  // Predicated region
  $region26: #{daonet_forward.1} parent=0 // pred_check
    _
  $region27: #{daonet_forward.1} parent=0 // pred_check_branch
    %25 = sbr.rel (0) target = $region29
  $region28: #{daonet_forward.1} parent=0 // pred_region
    _
  $region29: #{daonet_forward.1} parent=0 // pred_fallthru
    _
  %v27 = vld [vmem:[%s0] sm:$0xf]
  %v28 = vld [vmem:[%s0 + $0x4] sm:$0xf]
  %v29 = vld [vmem:[%s1] sm:$0xf]
  %v30 = vld [vmem:[%s1 + $0x4] sm:$0xf]
  %v31 = vld [vmem:[%s1 + $0x8] sm:$0xf]
  %v32 = vld [vmem:[%s1 + $0xc] sm:$0xf]
  %v33 = vld [vmem:[%s1 + $0x10] sm:$0xf]
  %v34 = vld [vmem:[%s1 + $0x14] sm:$0xf]
  %v35 = vld [vmem:[%s1 + $0x18] sm:$0x1]
  %v36 = vld [vmem:[%s2] sm:$0x1]
  %v38 = vlaneseq
  %v39 = vshrl.u32 %v38, 7
  %v40 = vsub.s32 0, %v39
  %v41 = vrot.slane %v36, %v40
  %v45 = vunpack.c.l.b16 %v27
  %v46 = vunpack.c.l.b16 %v28
  %v47 = vpack.c.b16 %v46, %v45
  %v55 = vunpack.c.l.b16 %v29
  %v56 = vunpack.c.l.b16 %v30
  %v57 = vunpack.c.l.b16 %v31
  %v58 = vunpack.c.l.b16 %v32
  %v59 = vunpack.c.l.b16 %v33
  %v60 = vunpack.c.l.b16 %v34
  %v61 = vunpack.c.l.b16 %v35
  %v62 = vpack.c.b16 %v56, %v55
  %v63 = vpack.c.b16 %v58, %v57
  %v64 = vpack.c.b16 %v60, %v59
  %v65 = vpack.c.b16 %v61, %v61
  %vm69 = vcmask 408576
  %v71 = vsel %vm69, %v47, 0
  %vm73 = vcmask 1040384
  %v75 = vsel %vm73, %v65, 0
  %77 = vmatprep.subr.bf16.mxu0 0
  %78 = vmatpush1.bf16.msra.mxu0 0
  %79 = vmatprep.subr.bf16.mxu0 0
  %80 = vmatpush1.bf16.msra.mxu0 0
  %81 = vmatprep.subr.bf16.mxu0 0
  %82 = vmatpush1.bf16.msra.mxu0 0
  %83 = vmatprep.subr.bf16.mxu0 0
  %84 = vmatpush1.bf16.msra.mxu0 0
  %85 = vmatprep.subr.bf16.mxu0 0
  %86 = vmatpush1.bf16.msra.mxu0 %v75
  %87 = vmatprep.subr.bf16.mxu0 0
  %88 = vmatpush1.bf16.msra.mxu0 %v64
  %89 = vmatprep.subr.bf16.mxu0 0
  %90 = vmatpush1.bf16.msra.mxu0 %v63
  %91 = vmatprep.subr.bf16.mxu0 0
  %92 = vmatpush1.bf16.msra.mxu0 %v62
  %93 = vmatprep.subr.bf16.mxu0 0
  %94 = vmatpush2.bf16.msra.mxu0 0
  %95 = vmatprep.subr.bf16.mxu0 0
  %96 = vmatpush2.bf16.msra.mxu0 0
  %97 = vmatprep.subr.bf16.mxu0 0
  %98 = vmatpush2.bf16.msra.mxu0 0
  %99 = vmatprep.subr.bf16.mxu0 0
  %100 = vmatpush2.bf16.msra.mxu0 0
  %101 = vmatprep.subr.bf16.mxu0 0
  %102 = vmatpush2.bf16.msra.mxu0 0
  %103 = vmatprep.subr.bf16.mxu0 0
  %104 = vmatpush2.bf16.msra.mxu0 0
  %105 = vmatprep.subr.bf16.mxu0 0
  %106 = vmatpush2.bf16.msra.mxu0 0
  %107 = vmatprep.subr.bf16.mxu0 0
  %108 = vmatpush2.bf16.msra.mxu0 0
  %109 = vmatprep.mubr.bf16.mxu0 0
  %110 = vmatmul.mubr.bf16.gmra.mxu0 %v71
  %v111 = vpop.f32.mrf.mxu0
  %v112 = vadd.f32 %v41, %v111
  %v113 = vpop.f32.mrf.mxu0
  %v114 = vpop.f32.mrf.mxu0
  %v115 = vadd.f32 %v41, %v114
  %v116 = vpop.f32.mrf.mxu0
  %117 = vdwg.mxu0
  %v118 = vmax.f32 %v112, 0.0
  %v119 = vmax.f32 %v115, 0.0
  %v120 = vpack.c.bf16 %v119, %v118
  %v121 = vld [vmem:[%s3] sm:$0xf]
  %v122 = vld [vmem:[%s3 + $0x4] sm:$0xf]
  %v123 = vld [vmem:[%s3 + $0x8] sm:$0xf]
  %v124 = vld [vmem:[%s3 + $0xc] sm:$0xf]
  %v125 = vld [vmem:[%s4] sm:$0x1]
  %v127 = vlaneseq
  %v128 = vshrl.u32 %v127, 7
  %v129 = vsub.s32 0, %v128
  %v130 = vrot.slane %v125, %v129
  %v136 = vunpack.c.l.b16 %v121
  %v137 = vunpack.c.l.b16 %v122
  %v138 = vunpack.c.l.b16 %v123
  %v139 = vunpack.c.l.b16 %v124
  %v140 = vpack.c.b16 %v137, %v136
  %v141 = vpack.c.b16 %v139, %v138
  %vm144 = vcmask 261120
  %v146 = vsel %vm144, %v120, 0
  %148 = vmatprep.subr.bf16.mxu0 0
  %149 = vmatpush1.bf16.msra.mxu0 0
  %150 = vmatprep.subr.bf16.mxu0 0
  %151 = vmatpush1.bf16.msra.mxu0 0
  %152 = vmatprep.subr.bf16.mxu0 0
  %153 = vmatpush1.bf16.msra.mxu0 0
  %154 = vmatprep.subr.bf16.mxu0 0
  %155 = vmatpush1.bf16.msra.mxu0 0
  %156 = vmatprep.subr.bf16.mxu0 0
  %157 = vmatpush1.bf16.msra.mxu0 0
  %158 = vmatprep.subr.bf16.mxu0 0
  %159 = vmatpush1.bf16.msra.mxu0 0
  %160 = vmatprep.subr.bf16.mxu0 0
  %161 = vmatpush1.bf16.msra.mxu0 %v141
  %162 = vmatprep.subr.bf16.mxu0 0
  %163 = vmatpush1.bf16.msra.mxu0 %v140
  %164 = vmatprep.subr.bf16.mxu0 0
  %165 = vmatpush2.bf16.msra.mxu0 0
  %166 = vmatprep.subr.bf16.mxu0 0
  %167 = vmatpush2.bf16.msra.mxu0 0
  %168 = vmatprep.subr.bf16.mxu0 0
  %169 = vmatpush2.bf16.msra.mxu0 0
  %170 = vmatprep.subr.bf16.mxu0 0
  %171 = vmatpush2.bf16.msra.mxu0 0
  %172 = vmatprep.subr.bf16.mxu0 0
  %173 = vmatpush2.bf16.msra.mxu0 0
  %174 = vmatprep.subr.bf16.mxu0 0
  %175 = vmatpush2.bf16.msra.mxu0 0
  %176 = vmatprep.subr.bf16.mxu0 0
  %177 = vmatpush2.bf16.msra.mxu0 0
  %178 = vmatprep.subr.bf16.mxu0 0
  %179 = vmatpush2.bf16.msra.mxu0 0
  %180 = vmatprep.mubr.bf16.mxu0 0
  %181 = vmatmul.mubr.bf16.gmra.mxu0 %v146
  %v182 = vpop.f32.mrf.mxu0
  %v183 = vadd.f32 %v130, %v182
  %v184 = vpop.f32.mrf.mxu0
  %v185 = vpop.f32.mrf.mxu0
  %v186 = vadd.f32 %v130, %v185
  %v187 = vpop.f32.mrf.mxu0
  %188 = vdwg.mxu0
  %v189 = vmax.f32 %v183, 0.0
  %v190 = vmax.f32 %v186, 0.0
  %191 = vxpose.xlu0.b32.start [1/16] %v189, 128
  %192 = vxpose.xlu0.b32.cont [2/16] %v190, 128
  %193 = vxpose.xlu0.b32.cont [3/16] 0.0, 128
  %194 = vxpose.xlu0.b32.cont [4/16] 0.0, 128
  %195 = vxpose.xlu0.b32.cont [5/16] 0.0, 128
  %196 = vxpose.xlu0.b32.cont [6/16] 0.0, 128
  %197 = vxpose.xlu0.b32.cont [7/16] 0.0, 128
  %198 = vxpose.xlu0.b32.cont [8/16] 0.0, 128
  %199 = vxpose.xlu0.b32.cont [9/16] 0.0, 128
  %200 = vxpose.xlu0.b32.cont [10/16] 0.0, 128
  %201 = vxpose.xlu0.b32.cont [11/16] 0.0, 128
  %202 = vxpose.xlu0.b32.cont [12/16] 0.0, 128
  %203 = vxpose.xlu0.b32.cont [13/16] 0.0, 128
  %204 = vxpose.xlu0.b32.cont [14/16] 0.0, 128
  %205 = vxpose.xlu0.b32.cont [15/16] 0.0, 128
  %206 = vxpose.xlu0.b32.end [16/16] 0.0, 128
  %v207 = vpop.trf.xlu0
  %v208 = vpop.trf.xlu0
  %v209 = vpop.trf.xlu0
  %v210 = vpop.trf.xlu0
  %v211 = vpop.trf.xlu0
  %v212 = vpop.trf.xlu0
  %v213 = vpop.trf.xlu0
  %v214 = vpop.trf.xlu0
  %v215 = vpop.trf.xlu0
  %v216 = vpop.trf.xlu0
  %v217 = vpop.trf.xlu0
  %v218 = vpop.trf.xlu0
  %v219 = vpop.trf.xlu0
  %v220 = vpop.trf.xlu0
  %v221 = vpop.trf.xlu0
  %v222 = vpop.trf.xlu0
  %v223 = vpack.c.bf16 %v208, %v207
  %v224 = vld [vmem:[%s5] sm:$0xf]
  %v225 = vld [vmem:[%s6] sm:$0xff]
  %227 = vset.pattern.permute.xlu0 0
  %228 = vperm.xlu0 %227, %v225
  %v229 = vpop.permute.xlu0 %228
  %vm231 = vcmask 130048
  %v233 = vsel %vm231, %v224, 0
  %235 = vmatprep.subr.bf16.mxu0 0
  %236 = vmatpush1.bf16.msra.mxu0 0
  %237 = vmatprep.subr.bf16.mxu0 0
  %238 = vmatpush1.bf16.msra.mxu0 0
  %239 = vmatprep.subr.bf16.mxu0 0
  %240 = vmatpush1.bf16.msra.mxu0 0
  %241 = vmatprep.subr.bf16.mxu0 0
  %242 = vmatpush1.bf16.msra.mxu0 0
  %243 = vmatprep.subr.bf16.mxu0 0
  %244 = vmatpush1.bf16.msra.mxu0 0
  %245 = vmatprep.subr.bf16.mxu0 0
  %246 = vmatpush1.bf16.msra.mxu0 0
  %247 = vmatprep.subr.bf16.mxu0 0
  %248 = vmatpush1.bf16.msra.mxu0 0
  %249 = vmatprep.subr.bf16.mxu0 0
  %250 = vmatpush1.bf16.msra.mxu0 %v223
  %251 = vmatprep.subr.bf16.mxu0 0
  %252 = vmatpush2.bf16.msra.mxu0 0
  %253 = vmatprep.subr.bf16.mxu0 0
  %254 = vmatpush2.bf16.msra.mxu0 0
  %255 = vmatprep.subr.bf16.mxu0 0
  %256 = vmatpush2.bf16.msra.mxu0 0
  %257 = vmatprep.subr.bf16.mxu0 0
  %258 = vmatpush2.bf16.msra.mxu0 0
  %259 = vmatprep.subr.bf16.mxu0 0
  %260 = vmatpush2.bf16.msra.mxu0 0
  %261 = vmatprep.subr.bf16.mxu0 0
  %262 = vmatpush2.bf16.msra.mxu0 0
  %263 = vmatprep.subr.bf16.mxu0 0
  %264 = vmatpush2.bf16.msra.mxu0 0
  %265 = vmatprep.subr.bf16.mxu0 0
  %266 = vmatpush2.bf16.msra.mxu0 0
  %267 = vmatprep.mubr.bf16.mxu0 0
  %268 = vmatmul.mubr.bf16.gmra.mxu0 %v233
  %v269 = vpop.f32.mrf.mxu0
  %v270 = vadd.f32 %v229, %v269
  %v271 = vpop.f32.mrf.mxu0
  %v272 = vpop.f32.mrf.mxu0
  %v273 = vpop.f32.mrf.mxu0
  %274 = vdwg.mxu0
  %275 = vst.msk [vmem:[%s7] sm:$0xff] %vm231, %v270
  // Predicated region
  $region30: #{daonet_forward.1} parent=0 // pred_check
    _
  $region31: #{daonet_forward.1} parent=0 // pred_check_branch
    %277 = sbr.rel (0) target = $region33
  $region32: #{daonet_forward.1} parent=0 // pred_region
    _
  $region33: #{daonet_forward.1} parent=0 // pred_fallthru
    _
  // Predicated region
  $region34: #{daonet_forward.1} parent=0 // pred_check
    _
  $region35: #{daonet_forward.1} parent=0 // pred_check_branch
    %279 = sbr.rel (0) target = $region37
  $region36: #{daonet_forward.1} parent=0 // pred_region
    _
  $region37: #{daonet_forward.1} parent=0 // pred_fallthru
    _

</llo_original>
